<compile_context>
chip_gen: v7x
topology: tpu7x:2x2x1
jax: 0.10.0
libtpu: 0.0.40
codegen_flags: <defaults>
</compile_context>

<pallas_src>
import functools

import jax
import jax.numpy as jnp
from jax import lax
from jax.experimental import pallas as pl
from jax.experimental.pallas import tpu as pltpu

EPS = 1e-5
NEG_SLOPE = 0.2
LANE = 128
SUBLANE = 8
VMEM_BUDGET = 36 * 1024 * 1024  # per-call block working-set target (v7x-safe)


def _round_up(x, m):
    return (x + m - 1) // m * m


def _divisor_tiles(dim, align, max_tile):
    """Divisors of `dim` that are multiples of `align` and <= max_tile (descending).
    Falls back to [dim] (full-extent block, always legal) if none exist."""
    cands = [d for d in range(align, min(dim, max_tile) + 1, align) if dim % d == 0]
    return sorted(cands, reverse=True) if cands else [dim]


# ---------------------------------------------------------------------------
# Fast path: fully fused conv + InstanceNorm + LeakyReLU (single pallas_call)
# ---------------------------------------------------------------------------
def _fused_vmem_bytes(P, tK, Cp, out_bytes):
    x_b = 2 * P * tK * 2          # bf16 patch tile, double-buffered
    w_b = 2 * tK * Cp * 2         # bf16 weight tile, double-buffered
    o_b = 2 * P * Cp * out_bytes  # output tile, double-buffered
    acc = P * Cp * 4              # f32 accumulator scratch
    return x_b + w_b + o_b + acc


def _pick_tk_fused(P, Kp, Cp, out_bytes):
    for tk in _divisor_tiles(Kp, LANE, 2048):
        if _fused_vmem_bytes(P, tk, Cp, out_bytes) <= VMEM_BUDGET:
            return tk
    return LANE


def _fused_kernel(x_ref, w_ref, o_ref, acc_sc, *, inv_p):
    # x_ref: [1, P, tK] bf16 | w_ref: [tK, Cp] bf16 | o_ref: [1, P, Cp]
    k = pl.program_id(1)

    @pl.when(k == 0)
    def _():
        acc_sc[...] = jnp.zeros_like(acc_sc)

    # Conv-as-matmul on the MXU: bf16 operands, f32 accumulation.
    acc_sc[...] += jnp.dot(x_ref[0], w_ref[...],
                           preferred_element_type=jnp.float32)

    @pl.when(k == pl.num_programs(1) - 1)
    def _():
        y = acc_sc[...]                                       # [P, Cp] f32
        mean = jnp.sum(y, axis=0, keepdims=True) * inv_p      # [1, Cp]
        # Biased variance (matches InstanceNorm2d); clamp guards the
        # E[y^2] - E[y]^2 form against tiny negative round-off.
        var = jnp.maximum(jnp.sum(y * y, axis=0, keepdims=True) * inv_p
                          - mean * mean, 0.0)
        rstd = lax.rsqrt(var + EPS)
        y_n = (y - mean) * rstd
        o_ref[0] = jnp.maximum(y_n, NEG_SLOPE * y_n).astype(o_ref.dtype)


def _fused_call(patches, w_mat, N, P, Kp, Cp, out_dtype):
    ob = jnp.dtype(out_dtype).itemsize
    tK = _pick_tk_fused(P, Kp, Cp, ob)
    nK = Kp // tK
    cost = pl.CostEstimate(
        flops=2 * N * P * Kp * Cp + 6 * N * P * Cp,
        transcendentals=N * Cp,
        bytes_accessed=N * P * Kp * 2 + N * Kp * Cp * 2 + N * P * Cp * ob)
    vmem_limit = min(max(_fused_vmem_bytes(P, tK, Cp, ob) + (8 << 20), 32 << 20),
                     64 << 20)
    return pl.pallas_call(
        functools.partial(_fused_kernel, inv_p=1.0 / P),
        out_shape=jax.ShapeDtypeStruct((N, P, Cp), out_dtype),
        grid_spec=pltpu.PrefetchScalarGridSpec(
            num_scalar_prefetch=0,
            grid=(N, nK),
            in_specs=[
                pl.BlockSpec((1, P, tK), lambda n, k: (n, 0, k)),
                pl.BlockSpec((tK, Cp), lambda n, k: (k, 0)),
            ],
            out_specs=pl.BlockSpec((1, P, Cp), lambda n, k: (n, 0, 0)),
            scratch_shapes=[pltpu.VMEM((P, Cp), jnp.float32)]),
        compiler_params=pltpu.CompilerParams(
            dimension_semantics=("parallel", "arbitrary"),
            vmem_limit_bytes=vmem_limit),
        cost_estimate=cost,
    )(patches, w_mat)


# ---------------------------------------------------------------------------
# Fallback path: two-pass (conv + stats, then normalize + LeakyReLU in place)
# ---------------------------------------------------------------------------
def _k1_vmem_bytes(tP, tK, Cp):
    x_b = 2 * tP * tK * 2                      # bf16 patch tile, double-buffered
    w_b = 2 * tK * Cp * 2                      # bf16 weight tile, double-buffered
    y_b = 2 * tP * Cp * 4                      # f32 conv-output tile, double-buffered
    st_b = 2 * 2 * SUBLANE * Cp * 4            # mean / rstd output blocks
    sc_b = tP * Cp * 4 + 2 * SUBLANE * Cp * 4  # accumulator + sum/sumsq scratch
    return x_b + w_b + y_b + st_b + sc_b


def _k2_vmem_bytes(tP, Cp):
    return 2 * 2 * tP * Cp * 4 + 2 * 2 * SUBLANE * Cp * 4


def _tile_plan(P, Kp, Cp):
    p_cands = _divisor_tiles(P, SUBLANE, 1024)
    k_cands = _divisor_tiles(Kp, LANE, 2048)
    tP, tK = p_cands[0], k_cands[0]
    for tk in k_cands:                         # shrink K tile first
        tK = tk
        if _k1_vmem_bytes(tP, tK, Cp) <= VMEM_BUDGET:
            break
    for tp in p_cands:                         # then the P tile
        tP = tp
        if _k1_vmem_bytes(tP, tK, Cp) <= VMEM_BUDGET:
            break
    return tP, tK


def _conv_stats_kernel(x_ref, w_ref, y_ref, mean_ref, rstd_ref,
                       acc_sc, sum_sc, sq_sc, *, inv_p):
    p = pl.program_id(1)
    k = pl.program_id(2)
    last_p = pl.num_programs(1) - 1
    last_k = pl.num_programs(2) - 1

    @pl.when((p == 0) & (k == 0))
    def _():
        sum_sc[...] = jnp.zeros_like(sum_sc)
        sq_sc[...] = jnp.zeros_like(sq_sc)

    @pl.when(k == 0)
    def _():
        acc_sc[...] = jnp.zeros_like(acc_sc)

    acc_sc[...] += jnp.dot(x_ref[0], w_ref[...],
                           preferred_element_type=jnp.float32)

    @pl.when(k == last_k)
    def _():
        y = acc_sc[...]
        y_ref[0] = y
        sum_sc[...] += jnp.sum(y, axis=0, keepdims=True)
        sq_sc[...] += jnp.sum(y * y, axis=0, keepdims=True)

    @pl.when((p == last_p) & (k == last_k))
    def _():
        mean = sum_sc[...] * inv_p
        var = jnp.maximum(sq_sc[...] * inv_p - mean * mean, 0.0)
        mean_ref[0] = mean
        rstd_ref[0] = lax.rsqrt(var + EPS)


def _norm_act_kernel(y_ref, mean_ref, rstd_ref, o_ref):
    y_n = (y_ref[0] - mean_ref[0]) * rstd_ref[0]
    o_ref[0] = jnp.maximum(y_n, NEG_SLOPE * y_n).astype(o_ref.dtype)


def _two_pass_call(patches, w_mat, N, P, Kp, Cp):
    tP, tK = _tile_plan(P, Kp, Cp)
    nP, nK = P // tP, Kp // tK

    k1_cost = pl.CostEstimate(
        flops=2 * N * P * Kp * Cp + 3 * N * P * Cp,
        transcendentals=N * Cp,
        bytes_accessed=(N * P * Kp * 2 + N * Kp * Cp * 2
                        + N * P * Cp * 4 + 2 * N * Cp * 4))
    y, mean, rstd = pl.pallas_call(
        functools.partial(_conv_stats_kernel, inv_p=1.0 / P),
        out_shape=(
            jax.ShapeDtypeStruct((N, P, Cp), jnp.float32),
            jax.ShapeDtypeStruct((N, 1, Cp), jnp.float32),
            jax.ShapeDtypeStruct((N, 1, Cp), jnp.float32),
        ),
        grid_spec=pltpu.PrefetchScalarGridSpec(
            num_scalar_prefetch=0,
            grid=(N, nP, nK),
            in_specs=[
                pl.BlockSpec((1, tP, tK), lambda n, p, k: (n, p, k)),
                pl.BlockSpec((tK, Cp), lambda n, p, k: (k, 0)),
            ],
            out_specs=[
                pl.BlockSpec((1, tP, Cp), lambda n, p, k: (n, p, 0)),
                pl.BlockSpec((1, 1, Cp), lambda n, p, k: (n, 0, 0)),
                pl.BlockSpec((1, 1, Cp), lambda n, p, k: (n, 0, 0)),
            ],
            scratch_shapes=[
                pltpu.VMEM((tP, Cp), jnp.float32),  # f32 matmul accumulator
                pltpu.VMEM((1, Cp), jnp.float32),   # per-channel sum
                pltpu.VMEM((1, Cp), jnp.float32),   # per-channel sum of squares
            ]),
        compiler_params=pltpu.CompilerParams(
            dimension_semantics=("parallel", "arbitrary", "arbitrary"),
            vmem_limit_bytes=min(max(_k1_vmem_bytes(tP, tK, Cp) + (8 << 20),
                                     32 << 20), 64 << 20)),
        cost_estimate=k1_cost,
    )(patches, w_mat)

    k2_cost = pl.CostEstimate(
        flops=3 * N * P * Cp,
        transcendentals=0,
        bytes_accessed=2 * N * P * Cp * 4 + 2 * N * Cp * 4)
    return pl.pallas_call(
        _norm_act_kernel,
        out_shape=jax.ShapeDtypeStruct((N, P, Cp), jnp.float32),
        grid_spec=pltpu.PrefetchScalarGridSpec(
            num_scalar_prefetch=0,
            grid=(N, nP),
            in_specs=[
                pl.BlockSpec((1, tP, Cp), lambda n, p: (n, p, 0)),
                pl.BlockSpec((1, 1, Cp), lambda n, p: (n, 0, 0)),
                pl.BlockSpec((1, 1, Cp), lambda n, p: (n, 0, 0)),
            ],
            out_specs=pl.BlockSpec((1, tP, Cp), lambda n, p: (n, p, 0)),
        ),
        compiler_params=pltpu.CompilerParams(
            dimension_semantics=("parallel", "parallel"),
            vmem_limit_bytes=min(max(_k2_vmem_bytes(tP, Cp) + (8 << 20),
                                     32 << 20), 64 << 20)),
        cost_estimate=k2_cost,
        input_output_aliases={0: 0},  # overwrite the unnormalized y buffer
    )(y, mean, rstd)


# ---------------------------------------------------------------------------
# Wrapper
# ---------------------------------------------------------------------------
@jax.jit
def simple_unet_down(x, weight):
    """x: [N, Cin, H, W] (NCHW), weight: [Cout, Cin, 4, 4] (OIHW, bias=False)."""
    N, Cin, H, W = x.shape
    Cout = weight.shape[0]
    assert H % 4 == 0 and W % 4 == 0, "k=4, s=4, p=0 conv needs H, W % 4 == 0"
    Ho, Wo = H // 4, W // 4
    P = Ho * Wo
    K = Cin * 16
    Kp = _round_up(K, LANE)      # lane-aligned contraction dim
    Cp = _round_up(Cout, LANE)   # lane-dense output channel dim

    # ---- glue: NCHW -> non-overlapping 4x4 patches [N, P, Kp], bf16 ----
    # Patch flatten order (ci, kh, kw) matches the OIHW weight layout.
    # TODO(synk): run the surrounding model in NHWC so this transpose (and the
    # final NCHW transpose) become pure reshapes instead of HBM round trips.
    patches = x.reshape(N, Cin, Ho, 4, Wo, 4).transpose(0, 2, 4, 1, 3, 5)
    patches = patches.reshape(N, P, K).astype(jnp.bfloat16)
    if Kp != K:
        patches = jnp.pad(patches, ((0, 0), (0, 0), (0, Kp - K)))

    w_mat = weight.reshape(Cout, K).T.astype(jnp.bfloat16)        # [K, Cout]
    w_mat = jnp.pad(w_mat, ((0, Kp - K), (0, Cp - Cout)))         # [Kp, Cp]

    out_dtype = x.dtype
    if _fused_vmem_bytes(P, LANE, Cp, jnp.dtype(out_dtype).itemsize) <= VMEM_BUDGET:
        # Fully fused: no HBM round trip of the unnormalized activation.
        out_p = _fused_call(patches, w_mat, N, P, Kp, Cp, out_dtype)
    else:
        out_p = _two_pass_call(patches, w_mat, N, P, Kp, Cp)

    # ---- glue: drop channel padding, back to NCHW ----
    out = out_p[:, :, :Cout].reshape(N, Ho, Wo, Cout).transpose(0, 3, 1, 2)
    return out.astype(x.dtype)


def _reference(x, weight):
    """Pure-JAX f32 reference mirroring the PyTorch forward."""
    y = lax.conv_general_dilated(
        x, weight, window_strides=(4, 4), padding="VALID",
        dimension_numbers=("NCHW", "OIHW", "NCHW"))
    mean = jnp.mean(y, axis=(2, 3), keepdims=True)
    var = jnp.mean((y - mean) ** 2, axis=(2, 3), keepdims=True)
    y_n = (y - mean) / jnp.sqrt(var + EPS)
    return jnp.where(y_n >= 0, y_n, NEG_SLOPE * y_n)


if __name__ == "__main__":
    key = jax.random.PRNGKey(0)
    k_x, k_w = jax.random.split(key)

    N, Cin, H, W = 2, 4, 16, 16
    Cout = 8

    x = jax.random.normal(k_x, (N, Cin, H, W), dtype=jnp.float32)
    weight = 0.1 * jax.random.normal(k_w, (Cout, Cin, 4, 4), dtype=jnp.float32)

    out = jax.block_until_ready(simple_unet_down(x, weight))
    ref = _reference(x, weight)

    assert out.shape == (N, Cout, H // 4, W // 4)
    assert out.dtype == x.dtype
    # bf16 MXU operands (f32 accumulation + f32 normalization) vs pure-f32
    # reference -> modest tolerance.
    assert jnp.allclose(out, ref, atol=5e-2, rtol=5e-2), float(
        jnp.max(jnp.abs(out - ref)))

    print("KERNEL_OK")
</pallas_src>

<mosaic_0001>
module attributes {stable_mosaic.version = 11 : i64} {
  func.func @_fused_kernel(%arg0: i32, %arg1: i32, %arg2: memref<1x16x128xbf16, #tpu.memory_space<vmem>>, %arg3: memref<128x128xbf16, #tpu.memory_space<vmem>>, %arg4: memref<1x16x128xf32, #tpu.memory_space<vmem>>, %arg5: memref<16x128xf32, #tpu.memory_space<vmem>>) attributes {dimension_semantics = [#tpu.dimension_semantics<parallel>, #tpu.dimension_semantics<arbitrary>], iteration_bounds = array<i64: 2, 1>, scalar_prefetch = 0 : i64, scratch_operands = 1 : i64, tpu.core_type = #tpu.core_type<tc>, window_params = [{transform_indices = @transform_0, window_bounds = array<i64: 1, 16, 128>}, {transform_indices = @transform_1, window_bounds = array<i64: 128, 128>}, {transform_indices = @transform_2, window_bounds = array<i64: 1, 16, 128>}]} {
    %c0_i32 = arith.constant 0 : i32
    %0 = arith.cmpi eq, %arg1, %c0_i32 : i32
    %1 = arith.extui %0 : i1 to i32
    %c0_i32_0 = arith.constant 0 : i32
    %2 = arith.cmpi ne, %1, %c0_i32_0 : i32
    scf.if %2 {
      %cst_11 = arith.constant 0.000000e+00 : f32
      %13 = vector.broadcast %cst_11 : f32 to vector<16x128xf32>
      %c0_12 = arith.constant 0 : index
      %c0_13 = arith.constant 0 : index
      %14 = vector.load %arg5[%c0_12, %c0_13] : memref<16x128xf32, #tpu.memory_space<vmem>>, vector<16x128xf32>
      tpu.vector_store %arg5[%c0_12, %c0_13], %13 {strides = array<i32>} : memref<16x128xf32, #tpu.memory_space<vmem>>, vector<16x128xf32>,
    } else {
    }
    %c0 = arith.constant 0 : index
    %c0_1 = arith.constant 0 : index
    %3 = vector.load %arg5[%c0, %c0_1] : memref<16x128xf32, #tpu.memory_space<vmem>>, vector<16x128xf32>
    %c0_2 = arith.constant 0 : index
    %c0_3 = arith.constant 0 : index
    %c0_4 = arith.constant 0 : index
    %4 = vector.load %arg2[%c0_2, %c0_3, %c0_4] : memref<1x16x128xbf16, #tpu.memory_space<vmem>>, vector<1x16x128xbf16>
    %5 = vector.shape_cast %4 : vector<1x16x128xbf16> to vector<16x128xbf16>
    %c0_5 = arith.constant 0 : index
    %c0_6 = arith.constant 0 : index
    %6 = vector.load %arg3[%c0_5, %c0_6] : memref<128x128xbf16, #tpu.memory_space<vmem>>, vector<128x128xbf16>
    %cst = arith.constant dense<0.000000e+00> : vector<16x128xf32>
    %7 = tpu.matmul %5, %6, %cst {dimension_numbers = #tpu.dot_dimension_numbers<[1], [0], [0], [1], [0, 0, 1, 1], [], []>} : vector<16x128xbf16>, vector<128x128xbf16>, vector<16x128xf32> -> vector<16x128xf32>
    %8 = arith.addf %3, %7 : vector<16x128xf32>
    %c0_7 = arith.constant 0 : index
    %c0_8 = arith.constant 0 : index
    %9 = vector.load %arg5[%c0_7, %c0_8] : memref<16x128xf32, #tpu.memory_space<vmem>>, vector<16x128xf32>
    tpu.vector_store %arg5[%c0_7, %c0_8], %8 {strides = array<i32>} : memref<16x128xf32, #tpu.memory_space<vmem>>, vector<16x128xf32>,
    %c0_i32_9 = arith.constant 0 : i32
    %10 = arith.cmpi eq, %arg1, %c0_i32_9 : i32
    %11 = arith.extui %10 : i1 to i32
    %c0_i32_10 = arith.constant 0 : i32
    %12 = arith.cmpi ne, %11, %c0_i32_10 : i32
    scf.if %12 {
      %c0_11 = arith.constant 0 : index
      %c0_12 = arith.constant 0 : index
      %13 = vector.load %arg5[%c0_11, %c0_12] : memref<16x128xf32, #tpu.memory_space<vmem>>, vector<16x128xf32>
      %cst_13 = arith.constant dense<0.000000e+00> : vector<128xf32>
      %14 = vector.multi_reduction <add>, %13, %cst_13 [0] : vector<16x128xf32> to vector<128xf32>
      %15 = vector.shape_cast %14 : vector<128xf32> to vector<1x128xf32>
      %cst_14 = arith.constant 6.250000e-02 : f32
      %16 = vector.broadcast %cst_14 : f32 to vector<1x128xf32>
      %17 = arith.mulf %15, %16 : vector<1x128xf32>
      %18 = arith.mulf %13, %13 : vector<16x128xf32>
      %cst_15 = arith.constant dense<0.000000e+00> : vector<128xf32>
      %19 = vector.multi_reduction <add>, %18, %cst_15 [0] : vector<16x128xf32> to vector<128xf32>
      %20 = vector.shape_cast %19 : vector<128xf32> to vector<1x128xf32>
      %cst_16 = arith.constant 6.250000e-02 : f32
      %21 = vector.broadcast %cst_16 : f32 to vector<1x128xf32>
      %22 = arith.mulf %20, %21 : vector<1x128xf32>
      %23 = arith.mulf %17, %17 : vector<1x128xf32>
      %24 = arith.subf %22, %23 : vector<1x128xf32>
      %cst_17 = arith.constant 0.000000e+00 : f32
      %25 = vector.broadcast %cst_17 : f32 to vector<1x128xf32>
      %26 = arith.maximumf %24, %25 : vector<1x128xf32>
      %cst_18 = arith.constant 9.99999974E-6 : f32
      %27 = vector.broadcast %cst_18 : f32 to vector<1x128xf32>
      %28 = arith.addf %26, %27 : vector<1x128xf32>
      %29 = math.rsqrt %28 : vector<1x128xf32>
      %30 = vector.broadcast %17 : vector<1x128xf32> to vector<16x128xf32>
      %31 = arith.subf %13, %30 : vector<16x128xf32>
      %32 = vector.broadcast %29 : vector<1x128xf32> to vector<16x128xf32>
      %33 = arith.mulf %31, %32 : vector<16x128xf32>
      %cst_19 = arith.constant 2.000000e-01 : f32
      %34 = vector.broadcast %cst_19 : f32 to vector<16x128xf32>
      %35 = arith.mulf %34, %33 : vector<16x128xf32>
      %36 = arith.maximumf %33, %35 : vector<16x128xf32>
      %c0_20 = arith.constant 0 : index
      %c0_21 = arith.constant 0 : index
      %c0_22 = arith.constant 0 : index
      %37 = vector.load %arg4[%c0_20, %c0_21, %c0_22] : memref<1x16x128xf32, #tpu.memory_space<vmem>>, vector<1x16x128xf32>
      %38 = vector.shape_cast %37 : vector<1x16x128xf32> to vector<16x128xf32>
      %39 = vector.shape_cast %36 : vector<16x128xf32> to vector<1x16x128xf32>
      tpu.vector_store %arg4[%c0_20, %c0_21, %c0_22], %39 {strides = array<i32>} : memref<1x16x128xf32, #tpu.memory_space<vmem>>, vector<1x16x128xf32>,
    } else {
    }
    return
  }
  func.func @transform_0(%arg0: i32, %arg1: i32) -> (i32, i32, i32) {
    %c0_i32 = arith.constant 0 : i32
    %c0_i32_0 = arith.constant 0 : i32
    return %arg0, %c0_i32, %arg1 : i32, i32, i32
  }
  func.func @transform_1(%arg0: i32, %arg1: i32) -> (i32, i32) {
    %c0_i32 = arith.constant 0 : i32
    %c0_i32_0 = arith.constant 0 : i32
    return %arg1, %c0_i32 : i32, i32
  }
  func.func @transform_2(%arg0: i32, %arg1: i32) -> (i32, i32, i32) {
    %c0_i32 = arith.constant 0 : i32
    %c0_i32_0 = arith.constant 0 : i32
    %c0_i32_1 = arith.constant 0 : i32
    return %arg0, %c0_i32, %c0_i32_0 : i32, i32, i32
  }
}

</mosaic_0001>

<llo_original>
// kernel: simple_unet_down.1
$region0: #{simple_unet_down.1}
  #allocation0 [shape = 'u32[]', space=smem, size = 0x4, offset = 0x4, fixed_abs, tag = 'smem constant byte address 0x4 - core index']
  #allocation1 [shape = 'u32[144,128]{1,0:T(1,128)}', space=vmem, size = 0x12000, scoped, tag = 'internal scratch']
  #allocation2 [shape = 'f32[16,128]{1,0:T(8,128)}', space=vmem, size = 0x2000, scoped, tag = 'scratch operand']
  %s0 = inlined_call_operand.vmem [shape: bf16[2,16,128], index: 0, kind: input, shape index: {}]
  %s1 = inlined_call_operand.vmem [shape: bf16[128,128], index: 1, kind: input, shape index: {}]
  %s2 = inlined_call_operand.hbm [shape: f32[2,16,128], index: 2, kind: output, shape index: {}]
  %s3 = sld [smem:[#allocation0]]
  $region49: #{simple_unet_down.1} parent=0
    _
  %s5 = ssub.s32 1, %s3
  %s6 = scalar_select 0, %s5, %s3
  $region1: #{simple_unet_down.1} parent=0
    #allocation3 [shape = 'u8[16384]{0}', space=vmem, size = 0x4000, scoped, tag = 'output window, operand 0']
    #allocation4 [shape = 's32[2]{0}', space=sflag, size = 0x8, scoped, tag = 'scoped memory for simple_unet_down.1']
    %7 = vsyncpa [#allocation4], 0
    %s8 = scalar_lea.sflag [#allocation4], 1
    %9 = vsyncpa %s8, 0
    loop: start=0, step=1, limit=4
    $region2: #{simple_unet_down.1} parent=1 // loop_pre_header
      _
    $region3: #{simple_unet_down.1} parent=1 // loop_header
      %s11 = sphi 0, %s15
      %p12 = scmp.ge.s32.totalorder %s11, 4
      %s18 = sphi 0, %s30
      %s19 = sphi 0, %s26
      %s20 = sphi 0, %s18
      %s21 = sphi 0, %s19
      %s22 = sphi 0, %s20
      %s23 = sphi 0, %s21
      %s35 = sphi 0, %s37
      %s38 = sphi 0, %s35
      %s39 = sphi 0, %s38
      %s55 = sphi 0, %s39
      %s61 = sphi 0, %s63
      %s64 = sphi 0, %s61
      %s65 = sphi 0, %s64
      %s81 = sphi 0, %s65
      %s87 = sphi 0, %s89
      %s90 = sphi 0, %s87
      %s91 = sphi 0, %s90
      %s107 = sphi 0, %s91
    $region4: #{simple_unet_down.1} parent=1 // loop_header_branch
      %14 = sbr.rel (%p12) target = $region8
    $region5: #{simple_unet_down.1} parent=1 // loop_body
      %s16 = ssub.s32 %s11, 1
      %s17 = ssub.s32 %s11, 2
      %s24 = sadd.s32 1, %s19
      %p25 = scmp.ge.s32.totalorder %s24, 1
      %s26 = scalar_select %p25, 0, %s24
      %s27 = sadd.s32 1, %s18
      %s28 = scalar_select %p25, %s27, %s18
      %p29 = scmp.ge.s32.totalorder %s28, 2
      %s30 = scalar_select %p29, 0, %s28
      %s31 = ssub.s32 %s18, %s30
      %s32 = ssub.s32 %s19, %s26
      %s33 = sor.u32 %s31, %s32
      %p34 = scmp.eq.s32.totalorder %s33, 0
      %s36 = sadd.s32 %s35, 1
      %s37 = scalar_select %p34, %s35, %s36
      %p40 = pneg %p34
      %p41 = scmp.eq.s32.totalorder %s11, 1
      %p42 = por %p40, %p41
      %p43 = scmp.ne.s32.totalorder %s35, %s38
      %p44 = scmp.eq.s32.totalorder %s11, 0
      %p45 = por %p43, %p44
      %p46 = scmp.ne.s32.totalorder %s35, %s38
      %p47 = scmp.eq.s32.totalorder %s16, 1
      %p48 = por %p46, %p47
      %p49 = scmp.ne.s32.totalorder %s38, %s39
      %p50 = scmp.eq.s32.totalorder %s16, 0
      %p51 = por %p49, %p50
      %p52 = scmp.ne.s32.totalorder %s38, %s39
      %p53 = scmp.eq.s32.totalorder %s17, 1
      %p54 = por %p52, %p53
      %p56 = scmp.ne.s32.totalorder %s39, %s55
      %p57 = scmp.eq.s32.totalorder %s17, 0
      %p58 = por %p56, %p57
      %s59 = ssub.s32 %s19, %s26
      %p60 = scmp.eq.s32.totalorder %s59, 0
      %s62 = sadd.s32 %s61, 1
      %s63 = scalar_select %p60, %s61, %s62
      %p66 = pneg %p60
      %p67 = scmp.eq.s32.totalorder %s11, 1
      %p68 = por %p66, %p67
      %p69 = scmp.ne.s32.totalorder %s61, %s64
      %p70 = scmp.eq.s32.totalorder %s11, 0
      %p71 = por %p69, %p70
      %p72 = scmp.ne.s32.totalorder %s61, %s64
      %p73 = scmp.eq.s32.totalorder %s16, 1
      %p74 = por %p72, %p73
      %p75 = scmp.ne.s32.totalorder %s64, %s65
      %p76 = scmp.eq.s32.totalorder %s16, 0
      %p77 = por %p75, %p76
      %p78 = scmp.ne.s32.totalorder %s64, %s65
      %p79 = scmp.eq.s32.totalorder %s17, 1
      %p80 = por %p78, %p79
      %p82 = scmp.ne.s32.totalorder %s65, %s81
      %p83 = scmp.eq.s32.totalorder %s17, 0
      %p84 = por %p82, %p83
      %s85 = ssub.s32 %s18, %s30
      %p86 = scmp.eq.s32.totalorder %s85, 0
      %s88 = sadd.s32 %s87, 1
      %s89 = scalar_select %p86, %s87, %s88
      %p92 = pneg %p86
      %p93 = scmp.eq.s32.totalorder %s11, 1
      %p94 = por %p92, %p93
      %p95 = scmp.ne.s32.totalorder %s87, %s90
      %p96 = scmp.eq.s32.totalorder %s11, 0
      %p97 = por %p95, %p96
      %p98 = scmp.ne.s32.totalorder %s87, %s90
      %p99 = scmp.eq.s32.totalorder %s16, 1
      %p100 = por %p98, %p99
      %p101 = scmp.ne.s32.totalorder %s90, %s91
      %p102 = scmp.eq.s32.totalorder %s16, 0
      %p103 = por %p101, %p102
      %p104 = scmp.ne.s32.totalorder %s90, %s91
      %p105 = scmp.eq.s32.totalorder %s17, 1
      %p106 = por %p104, %p105
      %p108 = scmp.ne.s32.totalorder %s91, %s107
      %p109 = scmp.eq.s32.totalorder %s17, 0
      %p110 = por %p108, %p109
      %p111 = scmp.le.s32.totalorder 1, %s11
      %p112 = scmp.lt.s32.totalorder %s11, 3
      %p113 = pnand %p111, %p112
      %p114 = pneg %p113
      // Predicated region
      $region9: #{simple_unet_down.1} parent=5 // pred_check
        _
      $region10: #{simple_unet_down.1} parent=5 // pred_check_branch
        %116 = sbr.rel (%p113) target = $region12
      $region11: #{simple_unet_down.1} parent=5 // pred_region
        %s117 = ssub.s32 %s11, 1
        // Predicated region
        $region13: #{simple_unet_down.1} parent=11 // pred_check
          %p118 = pneg %p77
        $region14: #{simple_unet_down.1} parent=11 // pred_check_branch
          %120 = sbr.rel (%p118) target = $region16
        $region15: #{simple_unet_down.1} parent=11 // pred_region
          %s121 = smul.u32 16, %s21
          %p122 = scmp.lt.s32.totalorder %s121, 15
          %s123 = scalar_select %p122, %s121, 15
          %s124 = smul.addr %s123, 4
          %s125 = scalar_lea.vmem %s1, %s124
          %s126 = smul.u32 16, %s21
        $region16: #{simple_unet_down.1} parent=11 // pred_fallthru
          _
      $region12: #{simple_unet_down.1} parent=5 // pred_fallthru
        _
      %p127 = scmp.lt.s32.totalorder %s11, 2
      // Predicated region
      $region17: #{simple_unet_down.1} parent=5 // pred_check
        %p128 = pneg %p127
      $region18: #{simple_unet_down.1} parent=5 // pred_check_branch
        %130 = sbr.rel (%p128) target = $region20
      $region19: #{simple_unet_down.1} parent=5 // pred_region
        // Predicated region
        $region21: #{simple_unet_down.1} parent=19 // pred_check
          %p131 = pneg %p45
        $region22: #{simple_unet_down.1} parent=19 // pred_check_branch
          %133 = sbr.rel (%p131) target = $region24
        $region23: #{simple_unet_down.1} parent=19 // pred_region
          %p134 = scmp.lt.s32.totalorder %s18, 1
          %s135 = scalar_select %p134, %s18, 1
          %p136 = scmp.lt.s32.totalorder %s19, 0
          %s137 = scalar_select %p136, %s19, 0
          %s138 = smul.addr %s135, 2
          %s139 = sadd.s32 %s137, %s138
          %s140 = smul.addr %s139, 4
          %s141 = scalar_lea.vmem %s0, %s140
        $region24: #{simple_unet_down.1} parent=19 // pred_fallthru
          _
      $region20: #{simple_unet_down.1} parent=5 // pred_fallthru
        _
      %p142 = scmp.le.s32.totalorder 1, %s11
      %p143 = scmp.lt.s32.totalorder %s11, 3
      %p144 = pnand %p142, %p143
      %p145 = pneg %p144
      // Predicated region
      $region25: #{simple_unet_down.1} parent=5 // pred_check
        _
      $region26: #{simple_unet_down.1} parent=5 // pred_check_branch
        %147 = sbr.rel (%p144) target = $region28
      $region27: #{simple_unet_down.1} parent=5 // pred_region
        %s148 = ssub.s32 %s11, 1
        %p149 = scmp.lt.s32.totalorder %s20, 1
        %s150 = scalar_select %p149, %s20, 1
        %p151 = scmp.lt.s32.totalorder %s21, 0
        %s152 = scalar_select %p151, %s21, 0
        %s153 = smul.addr %s150, 2
        %s154 = sadd.s32 %s152, %s153
        %s155 = smul.addr %s154, 4
        %s156 = scalar_lea.vmem %s0, %s155
        %p157 = pneg %p51
        %p158 = pneg %p48
        %s159 = smul.u32 16, %s21
        %p160 = scmp.lt.s32.totalorder %s159, 15
        %s161 = scalar_select %p160, %s159, 15
        %s162 = smul.addr %s161, 4
        %s163 = scalar_lea.vmem %s1, %s162
        %p164 = pneg %p77
        %p165 = pneg %p74
        %p166 = pneg %p103
        %p167 = pneg %p100
        %s168 = sand.u32 %s90, 1
        %s169 = scalar_lea.sflag [#allocation4], %s168
        %s170 = sand.u32 %s90, 1
        %s171 = smul.addr %s170, 16
        %s172 = scalar_lea.vmem [#allocation3], %s171
        %p173 = scmp.lt.s32.totalorder %s20, 1
        %s174 = scalar_select %p173, %s20, 1
        %p175 = scmp.lt.s32.totalorder %s21, 0
        %s176 = scalar_select %p175, %s21, 0
        %s177 = smul.addr %s174, 2
        %s178 = sadd.s32 %s176, %s177
        %s179 = smul.addr %s178, 4
        %s180 = scalar_lea.vmem %s0, %s179
        %s181 = smul.u32 16, %s21
        %p182 = scmp.lt.s32.totalorder %s181, 15
        %s183 = scalar_select %p182, %s181, 15
        %s184 = smul.addr %s183, 4
        %s185 = scalar_lea.vmem %s1, %s184
        %s186 = smul.u32 16, %s21
        %p188 = scmp.eq.s32.totalorder %s21, 0
        // Predicated region
        $region29: #{simple_unet_down.1} parent=27 // pred_check
          %p189 = pneg %p188
        $region30: #{simple_unet_down.1} parent=27 // pred_check_branch
          %191 = sbr.rel (%p189) target = $region32
        $region31: #{simple_unet_down.1} parent=27 // pred_region
          %192 = vst [vmem:[#allocation2] sm:$0xff] 0.0
          %193 = vst [vmem:[#allocation2 + $0x8] sm:$0xff] 0.0
        $region32: #{simple_unet_down.1} parent=27 // pred_fallthru
          _
        %v194 = vld [vmem:[#allocation2] sm:$0xff]
        %v195 = vld [vmem:[#allocation2 + $0x8] sm:$0xff]
        %v196 = vld [vmem:[%s180] sm:$0xf]
        %v197 = vld [vmem:[%s180 + $0x4] sm:$0xf]
        %v198 = vld [vmem:[%s185] sm:$0xf]
        %v199 = vld [vmem:[%s185 + $0x4] sm:$0xf]
        %v200 = vld [vmem:[%s185 + $0x8] sm:$0xf]
        %v201 = vld [vmem:[%s185 + $0xc] sm:$0xf]
        %v202 = vld [vmem:[%s185 + $0x10] sm:$0xf]
        %v203 = vld [vmem:[%s185 + $0x14] sm:$0xf]
        %v204 = vld [vmem:[%s185 + $0x18] sm:$0xf]
        %v205 = vld [vmem:[%s185 + $0x1c] sm:$0xf]
        %v206 = vld [vmem:[%s185 + $0x20] sm:$0xf]
        %v207 = vld [vmem:[%s185 + $0x24] sm:$0xf]
        %v208 = vld [vmem:[%s185 + $0x28] sm:$0xf]
        %v209 = vld [vmem:[%s185 + $0x2c] sm:$0xf]
        %v210 = vld [vmem:[%s185 + $0x30] sm:$0xf]
        %v211 = vld [vmem:[%s185 + $0x34] sm:$0xf]
        %v212 = vld [vmem:[%s185 + $0x38] sm:$0xf]
        %v213 = vld [vmem:[%s185 + $0x3c] sm:$0xf]
        %v216 = vunpack.c.l.b16 %v196
        %v217 = vunpack.c.l.b16 %v197
        %v218 = vpack.c.b16 %v217, %v216
        %v236 = vunpack.c.l.b16 %v198
        %v237 = vunpack.c.l.b16 %v199
        %v238 = vunpack.c.l.b16 %v200
        %v239 = vunpack.c.l.b16 %v201
        %v240 = vunpack.c.l.b16 %v202
        %v241 = vunpack.c.l.b16 %v203
        %v242 = vunpack.c.l.b16 %v204
        %v243 = vunpack.c.l.b16 %v205
        %v244 = vunpack.c.l.b16 %v206
        %v245 = vunpack.c.l.b16 %v207
        %v246 = vunpack.c.l.b16 %v208
        %v247 = vunpack.c.l.b16 %v209
        %v248 = vunpack.c.l.b16 %v210
        %v249 = vunpack.c.l.b16 %v211
        %v250 = vunpack.c.l.b16 %v212
        %v251 = vunpack.c.l.b16 %v213
        %v252 = vpack.c.b16 %v237, %v236
        %v253 = vpack.c.b16 %v239, %v238
        %v254 = vpack.c.b16 %v241, %v240
        %v255 = vpack.c.b16 %v243, %v242
        %v256 = vpack.c.b16 %v245, %v244
        %v257 = vpack.c.b16 %v247, %v246
        %v258 = vpack.c.b16 %v249, %v248
        %v259 = vpack.c.b16 %v251, %v250
        %268 = vmatprep.subr.bf16.mxu0 0
        %269 = vmatpush1.bf16.msra.mxu0 %v252
        %270 = vmatprep.subr.bf16.mxu0 0
        %271 = vmatpush1.bf16.msra.mxu0 %v253
        %272 = vmatprep.subr.bf16.mxu0 0
        %273 = vmatpush1.bf16.msra.mxu0 %v254
        %274 = vmatprep.subr.bf16.mxu0 0
        %275 = vmatpush1.bf16.msra.mxu0 %v255
        %276 = vmatprep.subr.bf16.mxu0 0
        %277 = vmatpush1.bf16.msra.mxu0 %v256
        %278 = vmatprep.subr.bf16.mxu0 0
        %279 = vmatpush1.bf16.msra.mxu0 %v257
        %280 = vmatprep.subr.bf16.mxu0 0
        %281 = vmatpush1.bf16.msra.mxu0 %v258
        %282 = vmatprep.subr.bf16.mxu0 0
        %283 = vmatpush1.bf16.msra.mxu0 %v259
        %284 = vmatprep.subr.bf16.mxu0 0
        %285 = vmatpush1.bf16.msra.mxu0 0
        %286 = vmatprep.subr.bf16.mxu0 0
        %287 = vmatpush1.bf16.msra.mxu0 0
        %288 = vmatprep.subr.bf16.mxu0 0
        %289 = vmatpush1.bf16.msra.mxu0 0
        %290 = vmatprep.subr.bf16.mxu0 0
        %291 = vmatpush1.bf16.msra.mxu0 0
        %292 = vmatprep.subr.bf16.mxu0 0
        %293 = vmatpush1.bf16.msra.mxu0 0
        %294 = vmatprep.subr.bf16.mxu0 0
        %295 = vmatpush1.bf16.msra.mxu0 0
        %296 = vmatprep.subr.bf16.mxu0 0
        %297 = vmatpush1.bf16.msra.mxu0 0
        %298 = vmatprep.subr.bf16.mxu0 0
        %299 = vmatpush1.bf16.msra.mxu0 0
        %300 = vmatprep.mubr.bf16.mxu0 0
        %301 = vmatmul.mubr.bf16.gmra.mrb[0].mxu0 %v218
        %v302 = vpop.f32.mrb[0].mxu0
        %v303 = vadd.f32 0.0, %v302
        %v304 = vpop.f32.mrb[0].mxu0
        %v305 = vpop.f32.mrb[0].mxu0
        %v306 = vadd.f32 0.0, %v305
        %v307 = vpop.f32.mrb[0].mxu0
        %308 = vdwg.mxu0
        %v309 = vadd.f32 %v194, %v303
        %v310 = vadd.f32 %v195, %v306
        %311 = vst [vmem:[#allocation2] sm:$0xff] %v309
        %312 = vst [vmem:[#allocation2 + $0x8] sm:$0xff] %v310
        // Predicated region
        $region33: #{simple_unet_down.1} parent=27 // pred_check
          %p313 = pneg %p188
        $region34: #{simple_unet_down.1} parent=27 // pred_check_branch
          %315 = sbr.rel (%p313) target = $region36
        $region35: #{simple_unet_down.1} parent=27 // pred_region
          %v316 = vld [vmem:[#allocation2] sm:$0xff]
          %v317 = vld [vmem:[#allocation2 + $0x8] sm:$0xff]
          %v318 = vadd.f32 %v316, %v317
          %v319 = vrot.slane %v318, 4
          %v320 = vadd.f32 %v318, %v319
          %v321 = vrot.slane %v320, 2
          %v322 = vadd.f32 %v320, %v321
          %v323 = vrot.slane %v322, 1
          %v324 = vadd.f32 %v322, %v323
          %v325 = vmul.f32 %v324, 0.0625
          %v326 = vmul.f32 %v316, %v316
          %v327 = vmul.f32 %v317, %v317
          %v328 = vadd.f32 %v326, %v327
          %v329 = vrot.slane %v328, 4
          %v330 = vadd.f32 %v328, %v329
          %v331 = vrot.slane %v330, 2
          %v332 = vadd.f32 %v330, %v331
          %v333 = vrot.slane %v332, 1
          %v334 = vadd.f32 %v332, %v333
          %v335 = vmul.f32 %v334, 0.0625
          %v336 = vmul.f32 %v325, %v325
          %v337 = vsub.f32 %v335, %v336
          %v338 = vmax.f32 %v337, 0.0
          %v339 = vadd.f32 %v338, 1e-05
          %v340 = vrsqrt.pop %v339
          %v341 = vsub.f32 %v316, %v325
          %v342 = vsub.f32 %v317, %v325
          %v343 = vmul.f32 %v341, %v340
          %v344 = vmul.f32 %v342, %v340
          %v345 = vmul.f32 %v343, 0.2
          %v346 = vmul.f32 %v344, 0.2
          %v347 = vmax.f32 %v343, %v345
          %v348 = vmax.f32 %v344, %v346
          %349 = vst [vmem:[%s172] sm:$0xff] %v347
          %350 = vst [vmem:[%s172 + $0x8] sm:$0xff] %v348
        $region36: #{simple_unet_down.1} parent=27 // pred_fallthru
          _
        %s351 = sand.u32 %s90, 1
        %s352 = scalar_lea.sflag [#allocation4], %s351
        %s353 = sand.u32 %s90, 1
        %s354 = smul.addr %s353, 16
        %s355 = scalar_lea.vmem [#allocation3], %s354
        // Predicated region
        $region37: #{simple_unet_down.1} parent=27 // pred_check
          %p356 = pneg %p100
        $region38: #{simple_unet_down.1} parent=27 // pred_check_branch
          %358 = sbr.rel (%p356) target = $region40
        $region39: #{simple_unet_down.1} parent=27 // pred_region
          %s360 = ssub.s32 256, 256
          %361 = vsyncadd %s352, %s360
          %s362 = smul.addr %s20, 2
          %s363 = smul.addr %s362, 128
          %s364 = scalar_lea.hbm %s2, %s363
          %s365 = sshll.u32 %s355, 4
          %s366 = int_to_ptr.vmem [resolvable:$true] %s365
          %371 = dma.vmem_to_hbm [thread:$0]  %s366, 256, %s364, %s352, 128, 128, 8
        $region40: #{simple_unet_down.1} parent=27 // pred_fallthru
          _
      $region28: #{simple_unet_down.1} parent=5 // pred_fallthru
        _
      %p372 = scmp.le.s32.totalorder 2, %s11
      // Predicated region
      $region41: #{simple_unet_down.1} parent=5 // pred_check
        %p373 = pneg %p372
      $region42: #{simple_unet_down.1} parent=5 // pred_check_branch
        %375 = sbr.rel (%p373) target = $region44
      $region43: #{simple_unet_down.1} parent=5 // pred_region
        %s376 = ssub.s32 %s11, 2
        // Predicated region
        $region45: #{simple_unet_down.1} parent=43 // pred_check
          %p377 = pneg %p106
        $region46: #{simple_unet_down.1} parent=43 // pred_check_branch
          %379 = sbr.rel (%p377) target = $region48
        $region47: #{simple_unet_down.1} parent=43 // pred_region
          %s380 = sand.u32 %s91, 1
          %s381 = scalar_lea.sflag [#allocation4], %s380
          %s382 = sand.u32 %s91, 1
          %s383 = smul.addr %s382, 16
          %s384 = scalar_lea.vmem [#allocation3], %s383
          %385 = dma.done %s381, 256
        $region48: #{simple_unet_down.1} parent=43 // pred_fallthru
          _
      $region44: #{simple_unet_down.1} parent=5 // pred_fallthru
        _
    $region6: #{simple_unet_down.1} parent=1 // loop_footer
      %s15 = sadd.s32 1, %s11
    $region7: #{simple_unet_down.1} parent=1 // loop_footer_branch
      %10 = sbr.rel target = $region3
    $region8: #{simple_unet_down.1} parent=1 // loop_exit
      _
    %386 = vsyncpa [#allocation4], 1
    %s387 = scalar_lea.sflag [#allocation4], 1
    %388 = vsyncpa %s387, 1

</llo_original>
